<compile_context>
chip_gen: v6e
topology: v6e:2x2x1
jax: 0.10.0
libtpu: 0.0.40
codegen_flags: <defaults>
</compile_context>

<pallas_src>
import functools

import jax
import jax.numpy as jnp
from jax.experimental import pallas as pl
from jax.experimental.pallas import tpu as pltpu


# ----------------------------------------------------------------------------
# In-kernel helpers (operate on VMEM/vreg values, channels x (batch*time) layout)
# ----------------------------------------------------------------------------
def _shift_causal(x, s, lane_in_seg, seg_len):
    """result[:, n] = x[:, n - s] within each seg_len lane segment; 0 where n%seg_len < s.

    Masking by (lane % seg_len) >= s kills both the roll wrap-around and any leakage
    across folded batch segments.
    """
    if s == 0:
        return x
    if s >= seg_len:
        return jnp.zeros_like(x)
    rolled = pltpu.roll(x, shift=s, axis=1)          # XLU lane rotate (jnp.roll semantics)
    return jnp.where(lane_in_seg >= s, rolled, 0.0)


def _build_slab(x_f32, K, dil, lane_in_seg, seg_len):
    """im2col slab: concat of causally shifted copies, shift j*dil for column block j."""
    taps = [_shift_causal(x_f32, j * dil, lane_in_seg, seg_len) for j in range(K)]
    slab = taps[0] if K == 1 else jnp.concatenate(taps, axis=0)
    return slab.astype(jnp.bfloat16)                  # single cast feeding the MXU


def _conv_glu(slab_bf16, w_bf16, b_f32, c_out):
    """One MXU push for the whole dilated conv, then bias + GLU (value * sigmoid(gate))."""
    acc = jnp.dot(w_bf16, slab_bf16, preferred_element_type=jnp.float32) + b_f32
    a = acc[:c_out, :]
    g = acc[c_out:, :]
    # sigmoid via exp (EUP) + approx reciprocal (EUP) — keeps the VALU slot free.
    sig = pl.reciprocal(1.0 + jnp.exp(-g), approx=True)
    return a * sig


def tcn_kernel(x_ref, *rest, layer_meta, use_skip, seg_len):
    """Whole-stack fused TCN forward for one batch group (batch folded into lanes).

    rest = (param refs in flat order ..., out_ref)
    layer_meta = tuple of (K, dil, c_out, has_down) per block (static).
    """
    out_ref = rest[-1]
    prefs = rest[:-1]

    n_lanes = x_ref.shape[-1]
    # hoisted once: lane index within each folded per-sample segment
    lane_in_seg = jax.lax.broadcasted_iota(jnp.int32, (1, n_lanes), 1) % seg_len

    x = x_ref[...].astype(jnp.float32)                # (C_in0, N), VMEM-resident throughout
    skip = None
    pi = 0
    for (K, dil, c_out, has_down) in layer_meta:
        c_in = x.shape[0]
        w1 = prefs[pi][...]
        b1 = prefs[pi + 1][...]
        w2 = prefs[pi + 2][...]
        b2 = prefs[pi + 3][...]
        pi += 4

        slab1 = _build_slab(x, K, dil, lane_in_seg, seg_len)     # (K*c_in, N) bf16
        h = _conv_glu(slab1, w1, b1, c_out)                      # (c_out, N) f32
        slab2 = _build_slab(h, K, dil, lane_in_seg, seg_len)     # (K*c_out, N) bf16
        y = _conv_glu(slab2, w2, b2, c_out)                      # (c_out, N) f32

        if has_down:
            wd = prefs[pi][...]
            bd = prefs[pi + 1][...]
            pi += 2
            # shift-0 tap of slab1 is exactly x in bf16 -> reuse (no duplicate cast)
            res = jnp.dot(wd, slab1[:c_in, :],
                          preferred_element_type=jnp.float32) + bd
        else:
            res = x

        out = jnp.maximum(y + res, 0.0)               # residual add + ReLU (dropout = id)
        skip = out if skip is None else skip + out
        x = out

    result = skip if use_skip else x
    out_ref[...] = result.astype(out_ref.dtype)       # lane-dense, unmasked store


# ----------------------------------------------------------------------------
# Wrapper: single pallas_call for the whole TCN, batch folded into lanes
# ----------------------------------------------------------------------------
def _const_index_map(ndim):
    return lambda g: (0,) * ndim


def _pick_batch_tile(batch, seg_len, max_lanes=2048):
    tb = 1
    for cand in range(1, batch + 1):
        if batch % cand == 0 and cand * seg_len <= max_lanes:
            tb = cand
    return tb


def _vmem_limit_bytes(layer_meta, c_in0, n_lanes, c_last, n_params_bytes):
    """Generous upper bound on the live set; clamped to the v7x 64 MiB ceiling."""
    act = 0
    c_prev = c_in0
    for (K, dil, c_out, has_down) in layer_meta:
        act += (2 * K * (c_prev + c_out)       # bf16 im2col slabs
                + 4 * 2 * (2 * c_out)          # f32 conv accumulators (pre/post GLU split)
                + 4 * 8 * c_out) * n_lanes     # f32 elementwise temporaries (h,y,res,out,skip)
        c_prev = c_out
    io = 2 * 2 * (c_in0 + c_last) * n_lanes * 4   # double-buffered input/output blocks
    est = 4 * act + io + 2 * n_params_bytes + (4 << 20)
    return int(min(max(est, 8 << 20), 64 << 20))


def shared_tcn_forward(layers, x_ncl, tcn_params):
    assert tcn_params["causal"], "only causal TCN implemented"
    K = tcn_params["kernel_size"]
    num_channels = tcn_params["num_channels"]
    use_skip = tcn_params["use_skip_connections"]

    B, C_in0, L = x_ncl.shape
    seg_len = ((L + 127) // 128) * 128            # lane-dense per-sample segment
    tb = _pick_batch_tile(B, seg_len)
    n_lanes = tb * seg_len
    num_groups = B // tb

    # Fold batch into the lane axis (layout plumbing in the wrapper, cheap in XLA):
    # (B, C, L) -> zero-pad time to seg_len -> (C, B*seg_len)
    x_pad = jnp.pad(x_ncl, ((0, 0), (0, 0), (0, seg_len - L)))
    x_fold = jnp.transpose(x_pad, (1, 0, 2)).reshape(C_in0, B * seg_len)

    flat_params = []
    meta = []
    for i, layer in enumerate(layers):
        d = 2 ** i
        c_out = num_channels[i]
        has_down = layer["wdown"] is not None
        meta.append((K, d, c_out, has_down))
        flat_params += [layer["w1"], layer["b1"], layer["w2"], layer["b2"]]
        if has_down:
            flat_params += [layer["wdown"], layer["bdown"]]

    in_specs = [pl.BlockSpec((C_in0, n_lanes), lambda g: (0, g))]
    for p in flat_params:
        # Constant index map: weights/biases are DMA'd once and stay VMEM-resident.
        in_specs.append(pl.BlockSpec(p.shape, _const_index_map(p.ndim)))

    c_last = num_channels[-1]
    n_params_bytes = sum(int(p.size) * p.dtype.itemsize for p in flat_params)
    limit = _vmem_limit_bytes(meta, C_in0, n_lanes, c_last, n_params_bytes)

    kern = functools.partial(tcn_kernel, layer_meta=tuple(meta),
                             use_skip=use_skip, seg_len=seg_len)

    out_fold = pl.pallas_call(
        kern,
        out_shape=jax.ShapeDtypeStruct((c_last, B * seg_len), x_ncl.dtype),
        grid=(num_groups,),
        in_specs=in_specs,
        out_specs=pl.BlockSpec((c_last, n_lanes), lambda g: (0, g)),
        compiler_params=pltpu.CompilerParams(
            dimension_semantics=("parallel",),    # batch groups split over TCs on v7x
            vmem_limit_bytes=limit,
        ),
    )(x_fold, *flat_params)

    # (C_last, B*seg_len) -> (B, C_last, L)
    return jnp.transpose(out_fold.reshape(c_last, B, seg_len)[:, :, :L], (1, 0, 2))


# ----------------------------------------------------------------------------
# Parameter init (deterministic, xavier_uniform for conv kernels)
# ----------------------------------------------------------------------------
def _xavier_uniform(key, shape, fan_in, fan_out):
    bound = (6.0 / (fan_in + fan_out)) ** 0.5
    return jax.random.uniform(key, shape, jnp.float32, -bound, bound)


def init_shared_tcn(key, tcn_params):
    # Conv weights stored pre-flattened as (2*C_out, K*C_in) bf16 with SHIFT-major
    # column blocks (block j <-> causal shift j*dil <-> PyTorch tap index K-1-j).
    # Biases kept in f32.  weight_norm is absorbed into these effective weights.
    num_inputs = tcn_params["num_inputs"]
    num_channels = tcn_params["num_channels"]
    K = tcn_params["kernel_size"]
    layers = []
    for i, c_out in enumerate(num_channels):
        c_in = num_inputs if i == 0 else num_channels[i - 1]
        key, k1, k2, k3, k4, k5, k6 = jax.random.split(key, 7)
        layer = {
            "w1": _xavier_uniform(k1, (2 * c_out, K * c_in),
                                  c_in * K, 2 * c_out * K).astype(jnp.bfloat16),
            "b1": jax.random.uniform(k2, (2 * c_out, 1), jnp.float32, -0.1, 0.1),
            "w2": _xavier_uniform(k3, (2 * c_out, K * c_out),
                                  c_out * K, 2 * c_out * K).astype(jnp.bfloat16),
            "b2": jax.random.uniform(k4, (2 * c_out, 1), jnp.float32, -0.1, 0.1),
            "wdown": None,
            "bdown": None,
        }
        if c_in != c_out:
            layer["wdown"] = _xavier_uniform(k5, (c_out, c_in),
                                             c_in, c_out).astype(jnp.bfloat16)
            layer["bdown"] = jax.random.uniform(k6, (c_out, 1), jnp.float32, -0.1, 0.1)
        layers.append(layer)
    return layers


# ----------------------------------------------------------------------------
if __name__ == "__main__":
    tcn_params = {
        "num_inputs": 4,
        "num_channels": [8, 8],
        "kernel_size": 3,
        "dropout": 0.1,          # identity at inference
        "causal": True,
        "use_norm": "weight_norm",
        "activation": "relu",
        "kernel_initializer": "xavier_uniform",
        "use_skip_connections": True,
    }
    B, L = 2, 16

    key = jax.random.PRNGKey(0)
    key, k_x, k_p = jax.random.split(key, 3)
    x = jax.random.normal(k_x, (B, tcn_params["num_inputs"], L), jnp.float32)  # NCL

    layers = init_shared_tcn(k_p, tcn_params)
    y = shared_tcn_forward(layers, x, tcn_params)
    jax.block_until_ready(y)

    assert y.shape == (B, tcn_params["num_channels"][-1], L), y.shape
    assert jnp.all(jnp.isfinite(y))
    print("KERNEL_OK")
</pallas_src>

<mosaic_0001>
module attributes {stable_mosaic.version = 11 : i64} {
  func.func @tcn_kernel(%arg0: i32, %arg1: memref<4x256xf32, #tpu.memory_space<vmem>>, %arg2: memref<16x12xbf16, #tpu.memory_space<vmem>>, %arg3: memref<16x1xf32, #tpu.memory_space<vmem>>, %arg4: memref<16x24xbf16, #tpu.memory_space<vmem>>, %arg5: memref<16x1xf32, #tpu.memory_space<vmem>>, %arg6: memref<8x4xbf16, #tpu.memory_space<vmem>>, %arg7: memref<8x1xf32, #tpu.memory_space<vmem>>, %arg8: memref<16x24xbf16, #tpu.memory_space<vmem>>, %arg9: memref<16x1xf32, #tpu.memory_space<vmem>>, %arg10: memref<16x24xbf16, #tpu.memory_space<vmem>>, %arg11: memref<16x1xf32, #tpu.memory_space<vmem>>, %arg12: memref<8x256xf32, #tpu.memory_space<vmem>>) attributes {dimension_semantics = [#tpu.dimension_semantics<parallel>], iteration_bounds = array<i64: 1>, scalar_prefetch = 0 : i64, scratch_operands = 0 : i64, tpu.core_type = #tpu.core_type<tc>, window_params = [{transform_indices = @transform_0, window_bounds = array<i64: 4, 256>}, {pipeline_mode = #tpu.pipeline_mode<synchronous>, transform_indices = @transform_1, window_bounds = array<i64: 16, 12>}, {pipeline_mode = #tpu.pipeline_mode<synchronous>, transform_indices = @transform_2, window_bounds = array<i64: 16, 1>}, {pipeline_mode = #tpu.pipeline_mode<synchronous>, transform_indices = @transform_3, window_bounds = array<i64: 16, 24>}, {pipeline_mode = #tpu.pipeline_mode<synchronous>, transform_indices = @transform_4, window_bounds = array<i64: 16, 1>}, {pipeline_mode = #tpu.pipeline_mode<synchronous>, transform_indices = @transform_5, window_bounds = array<i64: 8, 4>}, {pipeline_mode = #tpu.pipeline_mode<synchronous>, transform_indices = @transform_6, window_bounds = array<i64: 8, 1>}, {pipeline_mode = #tpu.pipeline_mode<synchronous>, transform_indices = @transform_7, window_bounds = array<i64: 16, 24>}, {pipeline_mode = #tpu.pipeline_mode<synchronous>, transform_indices = @transform_8, window_bounds = array<i64: 16, 1>}, {pipeline_mode = #tpu.pipeline_mode<synchronous>, transform_indices = @transform_9, window_bounds = array<i64: 16, 24>}, {pipeline_mode = #tpu.pipeline_mode<synchronous>, transform_indices = @transform_10, window_bounds = array<i64: 16, 1>}, {transform_indices = @transform_11, window_bounds = array<i64: 8, 256>}]} {
    %0 = tpu.iota {dimensions = array<i32: 1>} : vector<1x256xi32>
    %c128_i32 = arith.constant 128 : i32
    %c0_i32 = arith.constant 0 : i32
    %1 = arith.cmpi eq, %c128_i32, %c0_i32 : i32
    %c1_i32 = arith.constant 1 : i32
    %2 = arith.select %1, %c1_i32, %c128_i32 : i32
    %3 = vector.broadcast %2 : i32 to vector<1x256xi32>
    %4 = arith.remsi %0, %3 : vector<1x256xi32>
    %c0_i32_0 = arith.constant 0 : i32
    %5 = vector.broadcast %c0_i32_0 : i32 to vector<1x256xi32>
    %6 = arith.cmpi ne, %4, %5 : vector<1x256xi32>
    %c0_i32_1 = arith.constant 0 : i32
    %7 = vector.broadcast %c0_i32_1 : i32 to vector<1x256xi32>
    %8 = arith.cmpi slt, %4, %7 : vector<1x256xi32>
    %c0_i32_2 = arith.constant 0 : i32
    %9 = arith.cmpi slt, %2, %c0_i32_2 : i32
    %10 = vector.broadcast %9 : i1 to vector<1x256xi1>
    %11 = vector.broadcast %10 : vector<1x256xi1> to vector<1x256xi1>
    %12 = arith.xori %8, %11 : vector<1x256xi1>
    %13 = arith.andi %12, %6 : vector<1x256xi1>
    %14 = vector.broadcast %2 : i32 to vector<1x256xi32>
    %15 = arith.addi %4, %14 : vector<1x256xi32>
    %16 = arith.select %13, %15, %4 : vector<1x256xi1>, vector<1x256xi32>
    %c0 = arith.constant 0 : index
    %c0_3 = arith.constant 0 : index
    %17 = vector.load %arg1[%c0, %c0_3] : memref<4x256xf32, #tpu.memory_space<vmem>>, vector<4x256xf32>
    %c0_4 = arith.constant 0 : index
    %c0_5 = arith.constant 0 : index
    %18 = vector.load %arg2[%c0_4, %c0_5] : memref<16x12xbf16, #tpu.memory_space<vmem>>, vector<16x12xbf16>
    %c0_6 = arith.constant 0 : index
    %c0_7 = arith.constant 0 : index
    %19 = vector.load %arg3[%c0_6, %c0_7] : memref<16x1xf32, #tpu.memory_space<vmem>>, vector<16x1xf32>
    %c0_8 = arith.constant 0 : index
    %c0_9 = arith.constant 0 : index
    %20 = vector.load %arg4[%c0_8, %c0_9] : memref<16x24xbf16, #tpu.memory_space<vmem>>, vector<16x24xbf16>
    %c0_10 = arith.constant 0 : index
    %c0_11 = arith.constant 0 : index
    %21 = vector.load %arg5[%c0_10, %c0_11] : memref<16x1xf32, #tpu.memory_space<vmem>>, vector<16x1xf32>
    %c1_i32_12 = arith.constant 1 : i32
    %22 = tpu.dynamic_rotate %17 by %c1_i32_12 dim 1 : vector<4x256xf32>, i32 -> vector<4x256xf32>
    %c1_i32_13 = arith.constant 1 : i32
    %23 = vector.broadcast %c1_i32_13 : i32 to vector<1x256xi32>
    %24 = arith.cmpi sge, %16, %23 : vector<1x256xi32>
    %cst = arith.constant 0.000000e+00 : f32
    %25 = vector.shape_cast %24 : vector<1x256xi1> to vector<1x256xi1>
    %26 = vector.broadcast %25 : vector<1x256xi1> to vector<4x256xi1>
    %27 = vector.broadcast %cst : f32 to vector<4x256xf32>
    %28 = arith.select %26, %22, %27 : vector<4x256xi1>, vector<4x256xf32>
    %c2_i32 = arith.constant 2 : i32
    %29 = tpu.dynamic_rotate %17 by %c2_i32 dim 1 : vector<4x256xf32>, i32 -> vector<4x256xf32>
    %c2_i32_14 = arith.constant 2 : i32
    %30 = vector.broadcast %c2_i32_14 : i32 to vector<1x256xi32>
    %31 = arith.cmpi sge, %16, %30 : vector<1x256xi32>
    %cst_15 = arith.constant 0.000000e+00 : f32
    %32 = vector.shape_cast %31 : vector<1x256xi1> to vector<1x256xi1>
    %33 = vector.broadcast %32 : vector<1x256xi1> to vector<4x256xi1>
    %34 = vector.broadcast %cst_15 : f32 to vector<4x256xf32>
    %35 = arith.select %33, %29, %34 : vector<4x256xi1>, vector<4x256xf32>
    %36 = tpu.concatenate %17, %28, %35 in 0 : vector<4x256xf32>, vector<4x256xf32>, vector<4x256xf32> -> vector<12x256xf32>
    %37 = arith.truncf %36 : vector<12x256xf32> to vector<12x256xbf16>
    %cst_16 = arith.constant dense<0.000000e+00> : vector<16x256xf32>
    %38 = tpu.matmul %18, %37, %cst_16 {dimension_numbers = #tpu.dot_dimension_numbers<[1], [0], [0], [1], [0, 0, 1, 1], [], []>} : vector<16x12xbf16>, vector<12x256xbf16>, vector<16x256xf32> -> vector<16x256xf32>
    %39 = vector.broadcast %19 : vector<16x1xf32> to vector<16x256xf32>
    %40 = arith.addf %38, %39 : vector<16x256xf32>
    %41 = vector.extract_strided_slice %40 {offsets = [0, 0], sizes = [8, 256], strides = [1, 1]} : vector<16x256xf32> to vector<8x256xf32>
    %42 = vector.extract_strided_slice %40 {offsets = [8, 0], sizes = [8, 256], strides = [1, 1]} : vector<16x256xf32> to vector<8x256xf32>
    %cst_17 = arith.constant 0.000000e+00 : f32
    %43 = vector.broadcast %cst_17 : f32 to vector<8x256xf32>
    %44 = arith.subf %43, %42 : vector<8x256xf32>
    %45 = math.exp %44 : vector<8x256xf32>
    %cst_18 = arith.constant 1.000000e+00 : f32
    %46 = vector.broadcast %cst_18 : f32 to vector<8x256xf32>
    %47 = arith.addf %46, %45 : vector<8x256xf32>
    %48 = tpu.reciprocal %47 {approx = true} : vector<8x256xf32> -> vector<8x256xf32>
    %49 = arith.mulf %41, %48 : vector<8x256xf32>
    %c1_i32_19 = arith.constant 1 : i32
    %50 = tpu.dynamic_rotate %49 by %c1_i32_19 dim 1 : vector<8x256xf32>, i32 -> vector<8x256xf32>
    %c1_i32_20 = arith.constant 1 : i32
    %51 = vector.broadcast %c1_i32_20 : i32 to vector<1x256xi32>
    %52 = arith.cmpi sge, %16, %51 : vector<1x256xi32>
    %cst_21 = arith.constant 0.000000e+00 : f32
    %53 = vector.shape_cast %52 : vector<1x256xi1> to vector<1x256xi1>
    %54 = vector.broadcast %53 : vector<1x256xi1> to vector<8x256xi1>
    %55 = vector.broadcast %cst_21 : f32 to vector<8x256xf32>
    %56 = arith.select %54, %50, %55 : vector<8x256xi1>, vector<8x256xf32>
    %c2_i32_22 = arith.constant 2 : i32
    %57 = tpu.dynamic_rotate %49 by %c2_i32_22 dim 1 : vector<8x256xf32>, i32 -> vector<8x256xf32>
    %c2_i32_23 = arith.constant 2 : i32
    %58 = vector.broadcast %c2_i32_23 : i32 to vector<1x256xi32>
    %59 = arith.cmpi sge, %16, %58 : vector<1x256xi32>
    %cst_24 = arith.constant 0.000000e+00 : f32
    %60 = vector.shape_cast %59 : vector<1x256xi1> to vector<1x256xi1>
    %61 = vector.broadcast %60 : vector<1x256xi1> to vector<8x256xi1>
    %62 = vector.broadcast %cst_24 : f32 to vector<8x256xf32>
    %63 = arith.select %61, %57, %62 : vector<8x256xi1>, vector<8x256xf32>
    %64 = tpu.concatenate %49, %56, %63 in 0 : vector<8x256xf32>, vector<8x256xf32>, vector<8x256xf32> -> vector<24x256xf32>
    %65 = arith.truncf %64 : vector<24x256xf32> to vector<24x256xbf16>
    %cst_25 = arith.constant dense<0.000000e+00> : vector<16x256xf32>
    %66 = tpu.matmul %20, %65, %cst_25 {dimension_numbers = #tpu.dot_dimension_numbers<[1], [0], [0], [1], [0, 0, 1, 1], [], []>} : vector<16x24xbf16>, vector<24x256xbf16>, vector<16x256xf32> -> vector<16x256xf32>
    %67 = vector.broadcast %21 : vector<16x1xf32> to vector<16x256xf32>
    %68 = arith.addf %66, %67 : vector<16x256xf32>
    %69 = vector.extract_strided_slice %68 {offsets = [0, 0], sizes = [8, 256], strides = [1, 1]} : vector<16x256xf32> to vector<8x256xf32>
    %70 = vector.extract_strided_slice %68 {offsets = [8, 0], sizes = [8, 256], strides = [1, 1]} : vector<16x256xf32> to vector<8x256xf32>
    %cst_26 = arith.constant 0.000000e+00 : f32
    %71 = vector.broadcast %cst_26 : f32 to vector<8x256xf32>
    %72 = arith.subf %71, %70 : vector<8x256xf32>
    %73 = math.exp %72 : vector<8x256xf32>
    %cst_27 = arith.constant 1.000000e+00 : f32
    %74 = vector.broadcast %cst_27 : f32 to vector<8x256xf32>
    %75 = arith.addf %74, %73 : vector<8x256xf32>
    %76 = tpu.reciprocal %75 {approx = true} : vector<8x256xf32> -> vector<8x256xf32>
    %77 = arith.mulf %69, %76 : vector<8x256xf32>
    %c0_28 = arith.constant 0 : index
    %c0_29 = arith.constant 0 : index
    %78 = vector.load %arg6[%c0_28, %c0_29] : memref<8x4xbf16, #tpu.memory_space<vmem>>, vector<8x4xbf16>
    %c0_30 = arith.constant 0 : index
    %c0_31 = arith.constant 0 : index
    %79 = vector.load %arg7[%c0_30, %c0_31] : memref<8x1xf32, #tpu.memory_space<vmem>>, vector<8x1xf32>
    %80 = vector.extract_strided_slice %37 {offsets = [0, 0], sizes = [4, 256], strides = [1, 1]} : vector<12x256xbf16> to vector<4x256xbf16>
    %cst_32 = arith.constant dense<0.000000e+00> : vector<8x256xf32>
    %81 = tpu.matmul %78, %80, %cst_32 {dimension_numbers = #tpu.dot_dimension_numbers<[1], [0], [0], [1], [0, 0, 1, 1], [], []>} : vector<8x4xbf16>, vector<4x256xbf16>, vector<8x256xf32> -> vector<8x256xf32>
    %82 = vector.broadcast %79 : vector<8x1xf32> to vector<8x256xf32>
    %83 = arith.addf %81, %82 : vector<8x256xf32>
    %84 = arith.addf %77, %83 : vector<8x256xf32>
    %cst_33 = arith.constant 0.000000e+00 : f32
    %85 = vector.broadcast %cst_33 : f32 to vector<8x256xf32>
    %86 = arith.maximumf %84, %85 : vector<8x256xf32>
    %c0_34 = arith.constant 0 : index
    %c0_35 = arith.constant 0 : index
    %87 = vector.load %arg8[%c0_34, %c0_35] : memref<16x24xbf16, #tpu.memory_space<vmem>>, vector<16x24xbf16>
    %c0_36 = arith.constant 0 : index
    %c0_37 = arith.constant 0 : index
    %88 = vector.load %arg9[%c0_36, %c0_37] : memref<16x1xf32, #tpu.memory_space<vmem>>, vector<16x1xf32>
    %c0_38 = arith.constant 0 : index
    %c0_39 = arith.constant 0 : index
    %89 = vector.load %arg10[%c0_38, %c0_39] : memref<16x24xbf16, #tpu.memory_space<vmem>>, vector<16x24xbf16>
    %c0_40 = arith.constant 0 : index
    %c0_41 = arith.constant 0 : index
    %90 = vector.load %arg11[%c0_40, %c0_41] : memref<16x1xf32, #tpu.memory_space<vmem>>, vector<16x1xf32>
    %c2_i32_42 = arith.constant 2 : i32
    %91 = tpu.dynamic_rotate %86 by %c2_i32_42 dim 1 : vector<8x256xf32>, i32 -> vector<8x256xf32>
    %c2_i32_43 = arith.constant 2 : i32
    %92 = vector.broadcast %c2_i32_43 : i32 to vector<1x256xi32>
    %93 = arith.cmpi sge, %16, %92 : vector<1x256xi32>
    %cst_44 = arith.constant 0.000000e+00 : f32
    %94 = vector.shape_cast %93 : vector<1x256xi1> to vector<1x256xi1>
    %95 = vector.broadcast %94 : vector<1x256xi1> to vector<8x256xi1>
    %96 = vector.broadcast %cst_44 : f32 to vector<8x256xf32>
    %97 = arith.select %95, %91, %96 : vector<8x256xi1>, vector<8x256xf32>
    %c4_i32 = arith.constant 4 : i32
    %98 = tpu.dynamic_rotate %86 by %c4_i32 dim 1 : vector<8x256xf32>, i32 -> vector<8x256xf32>
    %c4_i32_45 = arith.constant 4 : i32
    %99 = vector.broadcast %c4_i32_45 : i32 to vector<1x256xi32>
    %100 = arith.cmpi sge, %16, %99 : vector<1x256xi32>
    %cst_46 = arith.constant 0.000000e+00 : f32
    %101 = vector.shape_cast %100 : vector<1x256xi1> to vector<1x256xi1>
    %102 = vector.broadcast %101 : vector<1x256xi1> to vector<8x256xi1>
    %103 = vector.broadcast %cst_46 : f32 to vector<8x256xf32>
    %104 = arith.select %102, %98, %103 : vector<8x256xi1>, vector<8x256xf32>
    %105 = tpu.concatenate %86, %97, %104 in 0 : vector<8x256xf32>, vector<8x256xf32>, vector<8x256xf32> -> vector<24x256xf32>
    %106 = arith.truncf %105 : vector<24x256xf32> to vector<24x256xbf16>
    %cst_47 = arith.constant dense<0.000000e+00> : vector<16x256xf32>
    %107 = tpu.matmul %87, %106, %cst_47 {dimension_numbers = #tpu.dot_dimension_numbers<[1], [0], [0], [1], [0, 0, 1, 1], [], []>} : vector<16x24xbf16>, vector<24x256xbf16>, vector<16x256xf32> -> vector<16x256xf32>
    %108 = vector.broadcast %88 : vector<16x1xf32> to vector<16x256xf32>
    %109 = arith.addf %107, %108 : vector<16x256xf32>
    %110 = vector.extract_strided_slice %109 {offsets = [0, 0], sizes = [8, 256], strides = [1, 1]} : vector<16x256xf32> to vector<8x256xf32>
    %111 = vector.extract_strided_slice %109 {offsets = [8, 0], sizes = [8, 256], strides = [1, 1]} : vector<16x256xf32> to vector<8x256xf32>
    %cst_48 = arith.constant 0.000000e+00 : f32
    %112 = vector.broadcast %cst_48 : f32 to vector<8x256xf32>
    %113 = arith.subf %112, %111 : vector<8x256xf32>
    %114 = math.exp %113 : vector<8x256xf32>
    %cst_49 = arith.constant 1.000000e+00 : f32
    %115 = vector.broadcast %cst_49 : f32 to vector<8x256xf32>
    %116 = arith.addf %115, %114 : vector<8x256xf32>
    %117 = tpu.reciprocal %116 {approx = true} : vector<8x256xf32> -> vector<8x256xf32>
    %118 = arith.mulf %110, %117 : vector<8x256xf32>
    %c2_i32_50 = arith.constant 2 : i32
    %119 = tpu.dynamic_rotate %118 by %c2_i32_50 dim 1 : vector<8x256xf32>, i32 -> vector<8x256xf32>
    %c2_i32_51 = arith.constant 2 : i32
    %120 = vector.broadcast %c2_i32_51 : i32 to vector<1x256xi32>
    %121 = arith.cmpi sge, %16, %120 : vector<1x256xi32>
    %cst_52 = arith.constant 0.000000e+00 : f32
    %122 = vector.shape_cast %121 : vector<1x256xi1> to vector<1x256xi1>
    %123 = vector.broadcast %122 : vector<1x256xi1> to vector<8x256xi1>
    %124 = vector.broadcast %cst_52 : f32 to vector<8x256xf32>
    %125 = arith.select %123, %119, %124 : vector<8x256xi1>, vector<8x256xf32>
    %c4_i32_53 = arith.constant 4 : i32
    %126 = tpu.dynamic_rotate %118 by %c4_i32_53 dim 1 : vector<8x256xf32>, i32 -> vector<8x256xf32>
    %c4_i32_54 = arith.constant 4 : i32
    %127 = vector.broadcast %c4_i32_54 : i32 to vector<1x256xi32>
    %128 = arith.cmpi sge, %16, %127 : vector<1x256xi32>
    %cst_55 = arith.constant 0.000000e+00 : f32
    %129 = vector.shape_cast %128 : vector<1x256xi1> to vector<1x256xi1>
    %130 = vector.broadcast %129 : vector<1x256xi1> to vector<8x256xi1>
    %131 = vector.broadcast %cst_55 : f32 to vector<8x256xf32>
    %132 = arith.select %130, %126, %131 : vector<8x256xi1>, vector<8x256xf32>
    %133 = tpu.concatenate %118, %125, %132 in 0 : vector<8x256xf32>, vector<8x256xf32>, vector<8x256xf32> -> vector<24x256xf32>
    %134 = arith.truncf %133 : vector<24x256xf32> to vector<24x256xbf16>
    %cst_56 = arith.constant dense<0.000000e+00> : vector<16x256xf32>
    %135 = tpu.matmul %89, %134, %cst_56 {dimension_numbers = #tpu.dot_dimension_numbers<[1], [0], [0], [1], [0, 0, 1, 1], [], []>} : vector<16x24xbf16>, vector<24x256xbf16>, vector<16x256xf32> -> vector<16x256xf32>
    %136 = vector.broadcast %90 : vector<16x1xf32> to vector<16x256xf32>
    %137 = arith.addf %135, %136 : vector<16x256xf32>
    %138 = vector.extract_strided_slice %137 {offsets = [0, 0], sizes = [8, 256], strides = [1, 1]} : vector<16x256xf32> to vector<8x256xf32>
    %139 = vector.extract_strided_slice %137 {offsets = [8, 0], sizes = [8, 256], strides = [1, 1]} : vector<16x256xf32> to vector<8x256xf32>
    %cst_57 = arith.constant 0.000000e+00 : f32
    %140 = vector.broadcast %cst_57 : f32 to vector<8x256xf32>
    %141 = arith.subf %140, %139 : vector<8x256xf32>
    %142 = math.exp %141 : vector<8x256xf32>
    %cst_58 = arith.constant 1.000000e+00 : f32
    %143 = vector.broadcast %cst_58 : f32 to vector<8x256xf32>
    %144 = arith.addf %143, %142 : vector<8x256xf32>
    %145 = tpu.reciprocal %144 {approx = true} : vector<8x256xf32> -> vector<8x256xf32>
    %146 = arith.mulf %138, %145 : vector<8x256xf32>
    %147 = arith.addf %146, %86 : vector<8x256xf32>
    %cst_59 = arith.constant 0.000000e+00 : f32
    %148 = vector.broadcast %cst_59 : f32 to vector<8x256xf32>
    %149 = arith.maximumf %147, %148 : vector<8x256xf32>
    %150 = arith.addf %86, %149 : vector<8x256xf32>
    %c0_60 = arith.constant 0 : index
    %c0_61 = arith.constant 0 : index
    %151 = vector.load %arg12[%c0_60, %c0_61] : memref<8x256xf32, #tpu.memory_space<vmem>>, vector<8x256xf32>
    tpu.vector_store %arg12[%c0_60, %c0_61], %150 {strides = array<i32>} : memref<8x256xf32, #tpu.memory_space<vmem>>, vector<8x256xf32>,
    return
  }
  func.func @transform_0(%arg0: i32) -> (i32, i32) {
    %c0_i32 = arith.constant 0 : i32
    %c0_i32_0 = arith.constant 0 : i32
    return %c0_i32, %arg0 : i32, i32
  }
  func.func @transform_1(%arg0: i32) -> (i32, i32) {
    %c0_i32 = arith.constant 0 : i32
    %c0_i32_0 = arith.constant 0 : i32
    %c0_i32_1 = arith.constant 0 : i32
    return %c0_i32, %c0_i32_0 : i32, i32
  }
  func.func @transform_2(%arg0: i32) -> (i32, i32) {
    %c0_i32 = arith.constant 0 : i32
    %c0_i32_0 = arith.constant 0 : i32
    %c0_i32_1 = arith.constant 0 : i32
    return %c0_i32, %c0_i32_0 : i32, i32
  }
  func.func @transform_3(%arg0: i32) -> (i32, i32) {
    %c0_i32 = arith.constant 0 : i32
    %c0_i32_0 = arith.constant 0 : i32
    %c0_i32_1 = arith.constant 0 : i32
    return %c0_i32, %c0_i32_0 : i32, i32
  }
  func.func @transform_4(%arg0: i32) -> (i32, i32) {
    %c0_i32 = arith.constant 0 : i32
    %c0_i32_0 = arith.constant 0 : i32
    %c0_i32_1 = arith.constant 0 : i32
    return %c0_i32, %c0_i32_0 : i32, i32
  }
  func.func @transform_5(%arg0: i32) -> (i32, i32) {
    %c0_i32 = arith.constant 0 : i32
    %c0_i32_0 = arith.constant 0 : i32
    %c0_i32_1 = arith.constant 0 : i32
    return %c0_i32, %c0_i32_0 : i32, i32
  }
  func.func @transform_6(%arg0: i32) -> (i32, i32) {
    %c0_i32 = arith.constant 0 : i32
    %c0_i32_0 = arith.constant 0 : i32
    %c0_i32_1 = arith.constant 0 : i32
    return %c0_i32, %c0_i32_0 : i32, i32
  }
  func.func @transform_7(%arg0: i32) -> (i32, i32) {
    %c0_i32 = arith.constant 0 : i32
    %c0_i32_0 = arith.constant 0 : i32
    %c0_i32_1 = arith.constant 0 : i32
    return %c0_i32, %c0_i32_0 : i32, i32
  }
  func.func @transform_8(%arg0: i32) -> (i32, i32) {
    %c0_i32 = arith.constant 0 : i32
    %c0_i32_0 = arith.constant 0 : i32
    %c0_i32_1 = arith.constant 0 : i32
    return %c0_i32, %c0_i32_0 : i32, i32
  }
  func.func @transform_9(%arg0: i32) -> (i32, i32) {
    %c0_i32 = arith.constant 0 : i32
    %c0_i32_0 = arith.constant 0 : i32
    %c0_i32_1 = arith.constant 0 : i32
    return %c0_i32, %c0_i32_0 : i32, i32
  }
  func.func @transform_10(%arg0: i32) -> (i32, i32) {
    %c0_i32 = arith.constant 0 : i32
    %c0_i32_0 = arith.constant 0 : i32
    %c0_i32_1 = arith.constant 0 : i32
    return %c0_i32, %c0_i32_0 : i32, i32
  }
  func.func @transform_11(%arg0: i32) -> (i32, i32) {
    %c0_i32 = arith.constant 0 : i32
    %c0_i32_0 = arith.constant 0 : i32
    return %c0_i32, %arg0 : i32, i32
  }
}

</mosaic_0001>

<llo_original>
// kernel: tpu_custom_call.1
$region0: #{tpu_custom_call.1}
  #allocation0 [shape = 'u32[]', space=smem, size = 0x4, offset = 0x4, fixed_abs, tag = 'smem constant byte address 0x4 - core index']
  #allocation1 [shape = 'u32[144,128]{1,0:T(1,128)}', space=vmem, size = 0x12000, scoped, tag = 'internal scratch']
  %s0 = inlined_call_operand.vmem [shape: f32[4,256], index: 0, kind: input, shape index: {}]
  %s1 = inlined_call_operand.vmem [shape: bf16[16,12], index: 1, kind: input, shape index: {}]
  %s2 = inlined_call_operand.vmem [shape: f32[16,1], index: 2, kind: input, shape index: {}]
  %s3 = inlined_call_operand.vmem [shape: bf16[16,24], index: 3, kind: input, shape index: {}]
  %s4 = inlined_call_operand.vmem [shape: f32[16,1], index: 4, kind: input, shape index: {}]
  %s5 = inlined_call_operand.vmem [shape: bf16[8,4], index: 5, kind: input, shape index: {}]
  %s6 = inlined_call_operand.vmem [shape: f32[8,1], index: 6, kind: input, shape index: {}]
  %s7 = inlined_call_operand.vmem [shape: bf16[16,24], index: 7, kind: input, shape index: {}]
  %s8 = inlined_call_operand.vmem [shape: f32[16,1], index: 8, kind: input, shape index: {}]
  %s9 = inlined_call_operand.vmem [shape: bf16[16,24], index: 9, kind: input, shape index: {}]
  %s10 = inlined_call_operand.vmem [shape: f32[16,1], index: 10, kind: input, shape index: {}]
  %s11 = inlined_call_operand.hbm [shape: f32[8,256], index: 11, kind: output, shape index: {}]
  %s12 = sld [smem:[#allocation0]]
  $region54: #{tpu_custom_call.1} parent=0
    _
  %s14 = ssub.s32 1, %s12
  %s15 = scalar_select 0, %s14, %s12
  $region1: #{tpu_custom_call.1} parent=0
    #allocation2 [shape = 'u8[8192]{0}', space=vmem, size = 0x2000, scoped, tag = 'output window, operand 0, single buffered']
    #allocation3 [shape = 's32[1]{0}', space=sflag, size = 0x4, scoped, tag = 'scoped memory for tpu_custom_call.1']
    %16 = vsyncpa [#allocation3], 0
    // Predicated region
    $region2: #{tpu_custom_call.1} parent=1 // pred_check
      _
    $region3: #{tpu_custom_call.1} parent=1 // pred_check_branch
      %18 = sbr.rel (0) target = $region5
    $region4: #{tpu_custom_call.1} parent=1 // pred_region
      _
    $region5: #{tpu_custom_call.1} parent=1 // pred_fallthru
      _
    // Predicated region
    $region6: #{tpu_custom_call.1} parent=1 // pred_check
      _
    $region7: #{tpu_custom_call.1} parent=1 // pred_check_branch
      %20 = sbr.rel (0) target = $region9
    $region8: #{tpu_custom_call.1} parent=1 // pred_region
      _
    $region9: #{tpu_custom_call.1} parent=1 // pred_fallthru
      _
    // Predicated region
    $region10: #{tpu_custom_call.1} parent=1 // pred_check
      _
    $region11: #{tpu_custom_call.1} parent=1 // pred_check_branch
      %22 = sbr.rel (0) target = $region13
    $region12: #{tpu_custom_call.1} parent=1 // pred_region
      _
    $region13: #{tpu_custom_call.1} parent=1 // pred_fallthru
      _
    // Predicated region
    $region14: #{tpu_custom_call.1} parent=1 // pred_check
      _
    $region15: #{tpu_custom_call.1} parent=1 // pred_check_branch
      %24 = sbr.rel (0) target = $region17
    $region16: #{tpu_custom_call.1} parent=1 // pred_region
      _
    $region17: #{tpu_custom_call.1} parent=1 // pred_fallthru
      _
    // Predicated region
    $region18: #{tpu_custom_call.1} parent=1 // pred_check
      _
    $region19: #{tpu_custom_call.1} parent=1 // pred_check_branch
      %26 = sbr.rel (0) target = $region21
    $region20: #{tpu_custom_call.1} parent=1 // pred_region
      _
    $region21: #{tpu_custom_call.1} parent=1 // pred_fallthru
      _
    // Predicated region
    $region22: #{tpu_custom_call.1} parent=1 // pred_check
      _
    $region23: #{tpu_custom_call.1} parent=1 // pred_check_branch
      %28 = sbr.rel (0) target = $region25
    $region24: #{tpu_custom_call.1} parent=1 // pred_region
      _
    $region25: #{tpu_custom_call.1} parent=1 // pred_fallthru
      _
    // Predicated region
    $region26: #{tpu_custom_call.1} parent=1 // pred_check
      _
    $region27: #{tpu_custom_call.1} parent=1 // pred_check_branch
      %30 = sbr.rel (0) target = $region29
    $region28: #{tpu_custom_call.1} parent=1 // pred_region
      _
    $region29: #{tpu_custom_call.1} parent=1 // pred_fallthru
      _
    // Predicated region
    $region30: #{tpu_custom_call.1} parent=1 // pred_check
      _
    $region31: #{tpu_custom_call.1} parent=1 // pred_check_branch
      %32 = sbr.rel (0) target = $region33
    $region32: #{tpu_custom_call.1} parent=1 // pred_region
      _
    $region33: #{tpu_custom_call.1} parent=1 // pred_fallthru
      _
    // Predicated region
    $region34: #{tpu_custom_call.1} parent=1 // pred_check
      _
    $region35: #{tpu_custom_call.1} parent=1 // pred_check_branch
      %34 = sbr.rel (0) target = $region37
    $region36: #{tpu_custom_call.1} parent=1 // pred_region
      _
    $region37: #{tpu_custom_call.1} parent=1 // pred_fallthru
      _
    // Predicated region
    $region38: #{tpu_custom_call.1} parent=1 // pred_check
      _
    $region39: #{tpu_custom_call.1} parent=1 // pred_check_branch
      %36 = sbr.rel (0) target = $region41
    $region40: #{tpu_custom_call.1} parent=1 // pred_region
      _
    $region41: #{tpu_custom_call.1} parent=1 // pred_fallthru
      _
    // Predicated region
    $region42: #{tpu_custom_call.1} parent=1 // pred_check
      _
    $region43: #{tpu_custom_call.1} parent=1 // pred_check_branch
      %38 = sbr.rel (0) target = $region45
    $region44: #{tpu_custom_call.1} parent=1 // pred_region
      _
    $region45: #{tpu_custom_call.1} parent=1 // pred_fallthru
      _
    %v40 = vlaneseq
    %v41 = vand.u32 %v40, 127
    %v42 = vadd.s32 %v41, 128
    %vm43 = vcmp.lt.s32.totalorder %v41, 0
    %v44 = vsub.s32 0, %v41
    %v45 = vsel %vm43, %v44, %v41
    %v46 = vshrl.u32 %v45, 7
    %v47 = vand.u32 %v45, 127
    %v48 = vsub.s32 0, %v47
    %v49 = vsel %vm43, %v48, %v47
    %vm50 = vcmp.lt.s32.totalorder %v42, 0
    %v51 = vsub.s32 0, %v42
    %v52 = vsel %vm50, %v51, %v42
    %v53 = vshrl.u32 %v52, 7
    %v54 = vand.u32 %v52, 127
    %v55 = vsub.s32 0, %v54
    %v56 = vsel %vm50, %v55, %v54
    %vm57 = vcmp.ne.s32.totalorder %v49, 0
    %vm58 = vcmp.ne.s32.totalorder %v56, 0
    %vm59 = vcmp.lt.s32.totalorder %v49, 0
    %vm60 = vcmp.lt.s32.totalorder %v56, 0
    %vm61 = vmand %vm59, %vm57
    %vm62 = vmand %vm60, %vm58
    %v63 = vadd.s32 %v49, 128
    %v64 = vadd.s32 %v56, 128
    %v65 = vsel %vm61, %v63, %v49
    %v66 = vsel %vm62, %v64, %v56
    %v67 = vld [vmem:[%s0] sm:$0xff]
    %v68 = vld [vmem:[%s1] sm:$0xf]
    %v69 = vld [vmem:[%s1 + $0x4] sm:$0xf]
    %v70 = vld [vmem:[%s2] sm:$0xff]
    %v71 = vld [vmem:[%s2 + $0x8] sm:$0xff]
    %v72 = vld [vmem:[%s3] sm:$0xf]
    %v73 = vld [vmem:[%s3 + $0x4] sm:$0xf]
    %v74 = vld [vmem:[%s4] sm:$0xff]
    %v75 = vld [vmem:[%s4 + $0x8] sm:$0xff]
    %v77 = vcombine.high %v67, %v67
    %79 = vrot.lane.b32.xlu0 %v67, 1
    %v80 = vpop.permute.xlu0 %79
    %81 = vrot.lane.b32.xlu0 %v77, 1
    %v82 = vpop.permute.xlu0 %81
    %vm83 = vcmp.lt.s32.totalorder %v41, 1
    %v84 = vsel %vm83, %v80, %v82
    %v85 = vsel %vm83, %v82, %v80
    %vm86 = vcmp.ge.s32.totalorder %v65, 1
    %vm87 = vcmp.ge.s32.totalorder %v66, 1
    %v88 = vsel %vm86, 1, 0
    %v89 = vsel %vm87, 1, 0
    %vm90 = vcmp.eq.s32.totalorder %v88, 1
    %vm91 = vcmp.eq.s32.totalorder %v89, 1
    %v92 = vsel %vm90, %v85, 0.0
    %v93 = vsel %vm91, %v84, 0.0
    %94 = vrot.lane.b32.xlu0 %v67, 2
    %v95 = vpop.permute.xlu0 %94
    %96 = vrot.lane.b32.xlu0 %v77, 2
    %v97 = vpop.permute.xlu0 %96
    %vm98 = vcmp.lt.s32.totalorder %v41, 2
    %v99 = vsel %vm98, %v95, %v97
    %v100 = vsel %vm98, %v97, %v95
    %vm101 = vcmp.ge.s32.totalorder %v65, 2
    %vm102 = vcmp.ge.s32.totalorder %v66, 2
    %v103 = vsel %vm101, 1, 0
    %v104 = vsel %vm102, 1, 0
    %vm105 = vcmp.eq.s32.totalorder %v103, 1
    %vm106 = vcmp.eq.s32.totalorder %v104, 1
    %v107 = vsel %vm105, %v100, 0.0
    %v108 = vsel %vm106, %v99, 0.0
    %v111 = vrot.slane %v92, 4
    %v112 = vrot.slane %v93, 4
    %vm115 = vcmask 1043456
    %v116 = vsel %vm115, %v67, %v111
    %v117 = vsel %vm115, %v77, %v112
    %v118 = vpack.c.bf16 %v107, %v116
    %v119 = vpack.c.bf16 %v108, %v117
    %121 = vset.pattern.permute.xlu0 0
    %122 = vperm.xlu0 %121, %v70
    %v123 = vpop.permute.xlu0 %122
    %126 = vset.pattern.permute.xlu0 0
    %127 = vperm.xlu0 %126, %v71
    %v128 = vpop.permute.xlu0 %127
    %v132 = vunpack.c.l.b16 %v68
    %v133 = vunpack.c.l.b16 %v69
    %v134 = vpack.c.b16 %v133, %v132
    %vm135 = vcmask 97280
    %v137 = vsel %vm135, %v134, 0
    %vm139 = vcmask 1045504
    %v141 = vsel %vm139, %v118, 0
    %v144 = vsel %vm139, %v119, 0
    %146 = vmatprep.subr.bf16.mxu0 0
    %147 = vmatpush1.bf16.msra.mxu0 0
    %148 = vmatprep.subr.bf16.mxu0 0
    %149 = vmatpush1.bf16.msra.mxu0 0
    %150 = vmatprep.subr.bf16.mxu0 0
    %151 = vmatpush1.bf16.msra.mxu0 0
    %152 = vmatprep.subr.bf16.mxu0 0
    %153 = vmatpush1.bf16.msra.mxu0 0
    %154 = vmatprep.subr.bf16.mxu0 0
    %155 = vmatpush1.bf16.msra.mxu0 0
    %156 = vmatprep.subr.bf16.mxu0 0
    %157 = vmatpush1.bf16.msra.mxu0 0
    %158 = vmatprep.subr.bf16.mxu0 0
    %159 = vmatpush1.bf16.msra.mxu0 0
    %160 = vmatprep.subr.bf16.mxu0 %v144
    %161 = vmatpush1.bf16.msra.mxu0 %v141
    %162 = vmatprep.subr.bf16.mxu0 0
    %163 = vmatpush2.bf16.msra.mxu0 0
    %164 = vmatprep.subr.bf16.mxu0 0
    %165 = vmatpush2.bf16.msra.mxu0 0
    %166 = vmatprep.subr.bf16.mxu0 0
    %167 = vmatpush2.bf16.msra.mxu0 0
    %168 = vmatprep.subr.bf16.mxu0 0
    %169 = vmatpush2.bf16.msra.mxu0 0
    %170 = vmatprep.subr.bf16.mxu0 0
    %171 = vmatpush2.bf16.msra.mxu0 0
    %172 = vmatprep.subr.bf16.mxu0 0
    %173 = vmatpush2.bf16.msra.mxu0 0
    %174 = vmatprep.subr.bf16.mxu0 0
    %175 = vmatpush2.bf16.msra.mxu0 0
    %176 = vmatprep.subr.bf16.mxu0 0
    %177 = vmatpush2.bf16.msra.mxu0 0
    %178 = vmatprep.mubr.bf16.mxu0 0
    %179 = vmatmul.mubr.bf16.gmra.mxu0 %v137
    %v180 = vpop.f32.mrf.mxu0
    %v181 = vadd.f32 %v123, %v180
    %v182 = vpop.f32.mrf.mxu0
    %v183 = vadd.f32 %v123, %v182
    %v184 = vpop.f32.mrf.mxu0
    %v185 = vadd.f32 %v128, %v184
    %v186 = vpop.f32.mrf.mxu0
    %v187 = vadd.f32 %v128, %v186
    %188 = vdwg.mxu0
    %v189 = vsub.f32 0.0, %v185
    %v190 = vsub.f32 0.0, %v187
    %v191 = vmul.f32 %v189, 1.442695
    %v192 = vpow.pop %v191
    %v193 = vmul.f32 %v190, 1.442695
    %v194 = vpow.pop %v193
    %v195 = vadd.f32 %v192, 1.0
    %v196 = vadd.f32 %v194, 1.0
    %v197 = vrcp.pop %v195
    %v198 = vrcp.pop %v196
    %v199 = vmul.f32 %v181, %v197
    %v200 = vmul.f32 %v183, %v198
    %201 = vrot.lane.b32.xlu0 %v199, 1
    %v202 = vpop.permute.xlu0 %201
    %203 = vrot.lane.b32.xlu0 %v200, 1
    %v204 = vpop.permute.xlu0 %203
    %v205 = vsel %vm83, %v202, %v204
    %v206 = vsel %vm83, %v204, %v202
    %v207 = vsel %vm90, %v206, 0.0
    %v208 = vsel %vm91, %v205, 0.0
    %209 = vrot.lane.b32.xlu0 %v199, 2
    %v210 = vpop.permute.xlu0 %209
    %211 = vrot.lane.b32.xlu0 %v200, 2
    %v212 = vpop.permute.xlu0 %211
    %v213 = vsel %vm98, %v210, %v212
    %v214 = vsel %vm98, %v212, %v210
    %v215 = vsel %vm105, %v214, 0.0
    %v216 = vsel %vm106, %v213, 0.0
    %v217 = vpack.c.bf16 %v207, %v199
    %v218 = vpack.c.bf16 %v208, %v200
    %v219 = vpack.c.bf16 %v215, %v215
    %v220 = vpack.c.bf16 %v216, %v216
    %222 = vset.pattern.permute.xlu0 0
    %223 = vperm.xlu0 %222, %v74
    %v224 = vpop.permute.xlu0 %223
    %227 = vset.pattern.permute.xlu0 0
    %228 = vperm.xlu0 %227, %v75
    %v229 = vpop.permute.xlu0 %228
    %v233 = vunpack.c.l.b16 %v72
    %v234 = vunpack.c.l.b16 %v73
    %v235 = vpack.c.b16 %v234, %v233
    %vm236 = vcmask 195584
    %v238 = vsel %vm236, %v235, 0
    %v241 = vsel %vm115, %v219, 0
    %v244 = vsel %vm115, %v220, 0
    %246 = vmatprep.subr.bf16.mxu0 0
    %247 = vmatpush1.bf16.msra.mxu0 0
    %248 = vmatprep.subr.bf16.mxu0 0
    %249 = vmatpush1.bf16.msra.mxu0 0
    %250 = vmatprep.subr.bf16.mxu0 0
    %251 = vmatpush1.bf16.msra.mxu0 0
    %252 = vmatprep.subr.bf16.mxu0 0
    %253 = vmatpush1.bf16.msra.mxu0 0
    %254 = vmatprep.subr.bf16.mxu0 0
    %255 = vmatpush1.bf16.msra.mxu0 0
    %256 = vmatprep.subr.bf16.mxu0 0
    %257 = vmatpush1.bf16.msra.mxu0 0
    %258 = vmatprep.subr.bf16.mxu0 %v244
    %259 = vmatpush1.bf16.msra.mxu0 %v241
    %260 = vmatprep.subr.bf16.mxu0 %v218
    %261 = vmatpush1.bf16.msra.mxu0 %v217
    %262 = vmatprep.subr.bf16.mxu0 0
    %263 = vmatpush2.bf16.msra.mxu0 0
    %264 = vmatprep.subr.bf16.mxu0 0
    %265 = vmatpush2.bf16.msra.mxu0 0
    %266 = vmatprep.subr.bf16.mxu0 0
    %267 = vmatpush2.bf16.msra.mxu0 0
    %268 = vmatprep.subr.bf16.mxu0 0
    %269 = vmatpush2.bf16.msra.mxu0 0
    %270 = vmatprep.subr.bf16.mxu0 0
    %271 = vmatpush2.bf16.msra.mxu0 0
    %272 = vmatprep.subr.bf16.mxu0 0
    %273 = vmatpush2.bf16.msra.mxu0 0
    %274 = vmatprep.subr.bf16.mxu0 0
    %275 = vmatpush2.bf16.msra.mxu0 0
    %276 = vmatprep.subr.bf16.mxu0 0
    %277 = vmatpush2.bf16.msra.mxu0 0
    %278 = vmatprep.mubr.bf16.mxu0 0
    %279 = vmatmul.mubr.bf16.gmra.mxu0 %v238
    %v280 = vpop.f32.mrf.mxu0
    %v281 = vadd.f32 %v224, %v280
    %v282 = vpop.f32.mrf.mxu0
    %v283 = vadd.f32 %v224, %v282
    %v284 = vpop.f32.mrf.mxu0
    %v285 = vadd.f32 %v229, %v284
    %v286 = vpop.f32.mrf.mxu0
    %v287 = vadd.f32 %v229, %v286
    %288 = vdwg.mxu0
    %v289 = vsub.f32 0.0, %v285
    %v290 = vsub.f32 0.0, %v287
    %v291 = vmul.f32 %v289, 1.442695
    %v292 = vpow.pop %v291
    %v293 = vmul.f32 %v290, 1.442695
    %v294 = vpow.pop %v293
    %v295 = vadd.f32 %v292, 1.0
    %v296 = vadd.f32 %v294, 1.0
    %v297 = vrcp.pop %v295
    %v298 = vrcp.pop %v296
    %v299 = vmul.f32 %v281, %v297
    %v300 = vmul.f32 %v283, %v298
    %v301 = vld [vmem:[%s5] sm:$0xf]
    %v302 = vld [vmem:[%s6] sm:$0xff]
    %304 = vset.pattern.permute.xlu0 0
    %305 = vperm.xlu0 %304, %v302
    %v306 = vpop.permute.xlu0 %305
    %vm308 = vcmask 31744
    %v310 = vsel %vm308, %v301, 0
    %vm312 = vcmask 1041408
    %v313 = vsel %vm312, %v118, 0
    %v315 = vsel %vm312, %v119, 0
    %317 = vmatprep.subr.bf16.mxu0 0
    %318 = vmatpush1.bf16.msra.mxu0 0
    %319 = vmatprep.subr.bf16.mxu0 0
    %320 = vmatpush1.bf16.msra.mxu0 0
    %321 = vmatprep.subr.bf16.mxu0 0
    %322 = vmatpush1.bf16.msra.mxu0 0
    %323 = vmatprep.subr.bf16.mxu0 0
    %324 = vmatpush1.bf16.msra.mxu0 0
    %325 = vmatprep.subr.bf16.mxu0 0
    %326 = vmatpush1.bf16.msra.mxu0 0
    %327 = vmatprep.subr.bf16.mxu0 0
    %328 = vmatpush1.bf16.msra.mxu0 0
    %329 = vmatprep.subr.bf16.mxu0 0
    %330 = vmatpush1.bf16.msra.mxu0 0
    %331 = vmatprep.subr.bf16.mxu0 %v315
    %332 = vmatpush1.bf16.msra.mxu0 %v313
    %333 = vmatprep.subr.bf16.mxu0 0
    %334 = vmatpush2.bf16.msra.mxu0 0
    %335 = vmatprep.subr.bf16.mxu0 0
    %336 = vmatpush2.bf16.msra.mxu0 0
    %337 = vmatprep.subr.bf16.mxu0 0
    %338 = vmatpush2.bf16.msra.mxu0 0
    %339 = vmatprep.subr.bf16.mxu0 0
    %340 = vmatpush2.bf16.msra.mxu0 0
    %341 = vmatprep.subr.bf16.mxu0 0
    %342 = vmatpush2.bf16.msra.mxu0 0
    %343 = vmatprep.subr.bf16.mxu0 0
    %344 = vmatpush2.bf16.msra.mxu0 0
    %345 = vmatprep.subr.bf16.mxu0 0
    %346 = vmatpush2.bf16.msra.mxu0 0
    %347 = vmatprep.subr.bf16.mxu0 0
    %348 = vmatpush2.bf16.msra.mxu0 0
    %349 = vmatprep.mubr.bf16.mxu0 0
    %350 = vmatmul.mubr.bf16.gmra.mxu0 %v310
    %v351 = vpop.f32.mrf.mxu0
    %v352 = vadd.f32 %v306, %v351
    %v353 = vpop.f32.mrf.mxu0
    %v354 = vadd.f32 %v306, %v353
    %v355 = vpop.f32.mrf.mxu0
    %v356 = vpop.f32.mrf.mxu0
    %357 = vdwg.mxu0
    %v358 = vadd.f32 %v299, %v352
    %v359 = vadd.f32 %v300, %v354
    %v360 = vmax.f32 %v358, 0.0
    %v361 = vmax.f32 %v359, 0.0
    %v362 = vld [vmem:[%s7] sm:$0xf]
    %v363 = vld [vmem:[%s7 + $0x4] sm:$0xf]
    %v364 = vld [vmem:[%s8] sm:$0xff]
    %v365 = vld [vmem:[%s8 + $0x8] sm:$0xff]
    %v366 = vld [vmem:[%s9] sm:$0xf]
    %v367 = vld [vmem:[%s9 + $0x4] sm:$0xf]
    %v368 = vld [vmem:[%s10] sm:$0xff]
    %v369 = vld [vmem:[%s10 + $0x8] sm:$0xff]
    %370 = vrot.lane.b32.xlu0 %v360, 2
    %v371 = vpop.permute.xlu0 %370
    %372 = vrot.lane.b32.xlu0 %v361, 2
    %v373 = vpop.permute.xlu0 %372
    %v374 = vsel %vm98, %v371, %v373
    %v375 = vsel %vm98, %v373, %v371
    %v376 = vsel %vm105, %v375, 0.0
    %v377 = vsel %vm106, %v374, 0.0
    %378 = vrot.lane.b32.xlu0 %v360, 4
    %v379 = vpop.permute.xlu0 %378
    %380 = vrot.lane.b32.xlu0 %v361, 4
    %v381 = vpop.permute.xlu0 %380
    %vm382 = vcmp.lt.s32.totalorder %v41, 4
    %v383 = vsel %vm382, %v379, %v381
    %v384 = vsel %vm382, %v381, %v379
    %vm385 = vcmp.ge.s32.totalorder %v65, 4
    %vm386 = vcmp.ge.s32.totalorder %v66, 4
    %v387 = vsel %vm385, 1, 0
    %v388 = vsel %vm386, 1, 0
    %vm389 = vcmp.eq.s32.totalorder %v387, 1
    %vm390 = vcmp.eq.s32.totalorder %v388, 1
    %v391 = vsel %vm389, %v384, 0.0
    %v392 = vsel %vm390, %v383, 0.0
    %v393 = vpack.c.bf16 %v376, %v360
    %v394 = vpack.c.bf16 %v377, %v361
    %v395 = vpack.c.bf16 %v391, %v391
    %v396 = vpack.c.bf16 %v392, %v392
    %398 = vset.pattern.permute.xlu0 0
    %399 = vperm.xlu0 %398, %v364
    %v400 = vpop.permute.xlu0 %399
    %403 = vset.pattern.permute.xlu0 0
    %404 = vperm.xlu0 %403, %v365
    %v405 = vpop.permute.xlu0 %404
    %v409 = vunpack.c.l.b16 %v362
    %v410 = vunpack.c.l.b16 %v363
    %v411 = vpack.c.b16 %v410, %v409
    %v413 = vsel %vm236, %v411, 0
    %v416 = vsel %vm115, %v395, 0
    %v419 = vsel %vm115, %v396, 0
    %421 = vmatprep.subr.bf16.mxu0 0
    %422 = vmatpush1.bf16.msra.mxu0 0
    %423 = vmatprep.subr.bf16.mxu0 0
    %424 = vmatpush1.bf16.msra.mxu0 0
    %425 = vmatprep.subr.bf16.mxu0 0
    %426 = vmatpush1.bf16.msra.mxu0 0
    %427 = vmatprep.subr.bf16.mxu0 0
    %428 = vmatpush1.bf16.msra.mxu0 0
    %429 = vmatprep.subr.bf16.mxu0 0
    %430 = vmatpush1.bf16.msra.mxu0 0
    %431 = vmatprep.subr.bf16.mxu0 0
    %432 = vmatpush1.bf16.msra.mxu0 0
    %433 = vmatprep.subr.bf16.mxu0 %v419
    %434 = vmatpush1.bf16.msra.mxu0 %v416
    %435 = vmatprep.subr.bf16.mxu0 %v394
    %436 = vmatpush1.bf16.msra.mxu0 %v393
    %437 = vmatprep.subr.bf16.mxu0 0
    %438 = vmatpush2.bf16.msra.mxu0 0
    %439 = vmatprep.subr.bf16.mxu0 0
    %440 = vmatpush2.bf16.msra.mxu0 0
    %441 = vmatprep.subr.bf16.mxu0 0
    %442 = vmatpush2.bf16.msra.mxu0 0
    %443 = vmatprep.subr.bf16.mxu0 0
    %444 = vmatpush2.bf16.msra.mxu0 0
    %445 = vmatprep.subr.bf16.mxu0 0
    %446 = vmatpush2.bf16.msra.mxu0 0
    %447 = vmatprep.subr.bf16.mxu0 0
    %448 = vmatpush2.bf16.msra.mxu0 0
    %449 = vmatprep.subr.bf16.mxu0 0
    %450 = vmatpush2.bf16.msra.mxu0 0
    %451 = vmatprep.subr.bf16.mxu0 0
    %452 = vmatpush2.bf16.msra.mxu0 0
    %453 = vmatprep.mubr.bf16.mxu0 0
    %454 = vmatmul.mubr.bf16.gmra.mxu0 %v413
    %v455 = vpop.f32.mrf.mxu0
    %v456 = vadd.f32 %v400, %v455
    %v457 = vpop.f32.mrf.mxu0
    %v458 = vadd.f32 %v400, %v457
    %v459 = vpop.f32.mrf.mxu0
    %v460 = vadd.f32 %v405, %v459
    %v461 = vpop.f32.mrf.mxu0
    %v462 = vadd.f32 %v405, %v461
    %463 = vdwg.mxu0
    %v464 = vsub.f32 0.0, %v460
    %v465 = vsub.f32 0.0, %v462
    %v466 = vmul.f32 %v464, 1.442695
    %v467 = vpow.pop %v466
    %v468 = vmul.f32 %v465, 1.442695
    %v469 = vpow.pop %v468
    %v470 = vadd.f32 %v467, 1.0
    %v471 = vadd.f32 %v469, 1.0
    %v472 = vrcp.pop %v470
    %v473 = vrcp.pop %v471
    %v474 = vmul.f32 %v456, %v472
    %v475 = vmul.f32 %v458, %v473
    %476 = vrot.lane.b32.xlu0 %v474, 2
    %v477 = vpop.permute.xlu0 %476
    %478 = vrot.lane.b32.xlu0 %v475, 2
    %v479 = vpop.permute.xlu0 %478
    %v480 = vsel %vm98, %v477, %v479
    %v481 = vsel %vm98, %v479, %v477
    %v482 = vsel %vm105, %v481, 0.0
    %v483 = vsel %vm106, %v480, 0.0
    %484 = vrot.lane.b32.xlu0 %v474, 4
    %v485 = vpop.permute.xlu0 %484
    %486 = vrot.lane.b32.xlu0 %v475, 4
    %v487 = vpop.permute.xlu0 %486
    %v488 = vsel %vm382, %v485, %v487
    %v489 = vsel %vm382, %v487, %v485
    %v490 = vsel %vm389, %v489, 0.0
    %v491 = vsel %vm390, %v488, 0.0
    %v492 = vpack.c.bf16 %v482, %v474
    %v493 = vpack.c.bf16 %v483, %v475
    %v494 = vpack.c.bf16 %v490, %v490
    %v495 = vpack.c.bf16 %v491, %v491
    %497 = vset.pattern.permute.xlu0 0
    %498 = vperm.xlu0 %497, %v368
    %v499 = vpop.permute.xlu0 %498
    %502 = vset.pattern.permute.xlu0 0
    %503 = vperm.xlu0 %502, %v369
    %v504 = vpop.permute.xlu0 %503
    %v508 = vunpack.c.l.b16 %v366
    %v509 = vunpack.c.l.b16 %v367
    %v510 = vpack.c.b16 %v509, %v508
    %v512 = vsel %vm236, %v510, 0
    %v515 = vsel %vm115, %v494, 0
    %v518 = vsel %vm115, %v495, 0
    %520 = vmatprep.subr.bf16.mxu0 0
    %521 = vmatpush1.bf16.msra.mxu0 0
    %522 = vmatprep.subr.bf16.mxu0 0
    %523 = vmatpush1.bf16.msra.mxu0 0
    %524 = vmatprep.subr.bf16.mxu0 0
    %525 = vmatpush1.bf16.msra.mxu0 0
    %526 = vmatprep.subr.bf16.mxu0 0
    %527 = vmatpush1.bf16.msra.mxu0 0
    %528 = vmatprep.subr.bf16.mxu0 0
    %529 = vmatpush1.bf16.msra.mxu0 0
    %530 = vmatprep.subr.bf16.mxu0 0
    %531 = vmatpush1.bf16.msra.mxu0 0
    %532 = vmatprep.subr.bf16.mxu0 %v518
    %533 = vmatpush1.bf16.msra.mxu0 %v515
    %534 = vmatprep.subr.bf16.mxu0 %v493
    %535 = vmatpush1.bf16.msra.mxu0 %v492
    %536 = vmatprep.subr.bf16.mxu0 0
    %537 = vmatpush2.bf16.msra.mxu0 0
    %538 = vmatprep.subr.bf16.mxu0 0
    %539 = vmatpush2.bf16.msra.mxu0 0
    %540 = vmatprep.subr.bf16.mxu0 0
    %541 = vmatpush2.bf16.msra.mxu0 0
    %542 = vmatprep.subr.bf16.mxu0 0
    %543 = vmatpush2.bf16.msra.mxu0 0
    %544 = vmatprep.subr.bf16.mxu0 0
    %545 = vmatpush2.bf16.msra.mxu0 0
    %546 = vmatprep.subr.bf16.mxu0 0
    %547 = vmatpush2.bf16.msra.mxu0 0
    %548 = vmatprep.subr.bf16.mxu0 0
    %549 = vmatpush2.bf16.msra.mxu0 0
    %550 = vmatprep.subr.bf16.mxu0 0
    %551 = vmatpush2.bf16.msra.mxu0 0
    %552 = vmatprep.mubr.bf16.mxu0 0
    %553 = vmatmul.mubr.bf16.gmra.mxu0 %v512
    %v554 = vpop.f32.mrf.mxu0
    %v555 = vadd.f32 %v499, %v554
    %v556 = vpop.f32.mrf.mxu0
    %v557 = vadd.f32 %v499, %v556
    %v558 = vpop.f32.mrf.mxu0
    %v559 = vadd.f32 %v504, %v558
    %v560 = vpop.f32.mrf.mxu0
    %v561 = vadd.f32 %v504, %v560
    %562 = vdwg.mxu0
    %v563 = vsub.f32 0.0, %v559
    %v564 = vsub.f32 0.0, %v561
    %v565 = vmul.f32 %v563, 1.442695
    %v566 = vpow.pop %v565
    %v567 = vmul.f32 %v564, 1.442695
    %v568 = vpow.pop %v567
    %v569 = vadd.f32 %v566, 1.0
    %v570 = vadd.f32 %v568, 1.0
    %v571 = vrcp.pop %v569
    %v572 = vrcp.pop %v570
    %v573 = vmul.f32 %v555, %v571
    %v574 = vmul.f32 %v557, %v572
    %v575 = vadd.f32 %v573, %v360
    %v576 = vadd.f32 %v574, %v361
    %v577 = vmax.f32 %v575, 0.0
    %v578 = vmax.f32 %v576, 0.0
    %v579 = vadd.f32 %v360, %v577
    %v580 = vadd.f32 %v361, %v578
    %581 = vst [vmem:[#allocation2] sm:$0xff] %v579
    %582 = vst [vmem:[#allocation2 + $0x8] sm:$0xff] %v580
    // Predicated region
    $region46: #{tpu_custom_call.1} parent=1 // pred_check
      _
    $region47: #{tpu_custom_call.1} parent=1 // pred_check_branch
      %584 = sbr.rel (0) target = $region49
    $region48: #{tpu_custom_call.1} parent=1 // pred_region
      %s586 = ssub.s32 256, 256
      %587 = vsyncadd [#allocation3], %s586
      %s589 = sshll.u32 [#allocation2], 4
      %s590 = int_to_ptr.vmem [resolvable:$true] %s589
      %592 = dma.vmem_to_hbm [thread:$0]  %s590, 256, %s11, [#allocation3]
    $region49: #{tpu_custom_call.1} parent=1 // pred_fallthru
      _
    // Predicated region
    $region50: #{tpu_custom_call.1} parent=1 // pred_check
      _
    $region51: #{tpu_custom_call.1} parent=1 // pred_check_branch
      %594 = sbr.rel (0) target = $region53
    $region52: #{tpu_custom_call.1} parent=1 // pred_region
      %595 = dma.done [#allocation3], 256
    $region53: #{tpu_custom_call.1} parent=1 // pred_fallthru
      _
    %596 = vsyncpa [#allocation3], 1

</llo_original>
